<compile_context>
chip_gen: v5e
topology: v5e:2x2
jax: 0.10.0
libtpu: 0.0.40
codegen_flags: <defaults>
</compile_context>

<pallas_src>
import functools

import jax
import jax.numpy as jnp
from jax import lax
from jax.experimental import pallas as pl
from jax.experimental.pallas import tpu as pltpu


# bf16 operands are MXU-native on v5e/v6e/v7x (f32 accumulation is kept via
# preferred_element_type).  Set to None for an exact f32 matmul path.
MATMUL_DTYPE = jnp.bfloat16


def _ntxent_stripe_kernel(zi_ref, zj_ref, packed_ref, colsum_ref, *,
                          batch_size: int, padded_batch: int, tile_m: int,
                          temperature: float):
    B, Bp, TM = batch_size, padded_batch, tile_m
    inv_t = 1.0 / temperature

    # Slice this grid step's row stripe out of the resident operands.
    row0 = pl.multiple_of(pl.program_id(0) * TM, TM)
    zi_s = zi_ref[pl.ds(row0, TM), :]                       # (TM, D), matmul dtype
    zj_s = zj_ref[pl.ds(row0, TM), :]                       # (TM, D)

    zi32 = zi_s.astype(jnp.float32)
    zj32 = zj_s.astype(jnp.float32)

    # positives: sim[k, k+B] == sim[k+B, k] == z_i[k]·z_j[k]  (rowwise dot)
    pos = jnp.sum(zi32 * zj32, axis=1, keepdims=True)        # (TM, 1)
    # self-similarities derived through the same precision path as the MXU
    # operands, so subtracting exp(self/T) cancels the diagonal of e_ii/e_jj.
    self_i = jnp.sum(zi32 * zi32, axis=1, keepdims=True)
    self_j = jnp.sum(zj32 * zj32, axis=1, keepdims=True)

    # A·Bᵀ on the MXU without materialising a transpose: contract feature dim.
    dn = (((1,), (1,)), ((), ()))
    s_ii = lax.dot_general(zi_s, zi_ref[...], dn, preferred_element_type=jnp.float32)
    s_ij = lax.dot_general(zi_s, zj_ref[...], dn, preferred_element_type=jnp.float32)
    s_jj = lax.dot_general(zj_s, zj_ref[...], dn, preferred_element_type=jnp.float32)

    # |sim| <= 1 after L2 normalisation -> exp(sim/T) cannot overflow.
    e_ii = jnp.exp(s_ii * inv_t)                             # (TM, Bp)
    e_ij = jnp.exp(s_ij * inv_t)
    e_jj = jnp.exp(s_jj * inv_t)

    if Bp != B:  # static: only emitted when the batch had to be padded
        col = lax.broadcasted_iota(jnp.int32, (TM, Bp), 1)
        col_ok = col < B
        e_ii = jnp.where(col_ok, e_ii, 0.0)
        e_jj = jnp.where(col_ok, e_jj, 0.0)
        row = row0 + lax.broadcasted_iota(jnp.int32, (TM, Bp), 0)
        e_ij = jnp.where(col_ok & (row < B), e_ij, 0.0)

    # i-half rows are fully resolved inside this stripe.
    den_i = (jnp.sum(e_ii, axis=1, keepdims=True)
             + jnp.sum(e_ij, axis=1, keepdims=True)
             - jnp.exp(self_i * inv_t))                      # (TM, 1)
    loss_i = jnp.log(den_i) - pos * inv_t

    # j-half rows: the S_jj contribution is per-stripe; the S_ji contribution
    # is the cross-stripe column sum of exp(S_ij/T) (folded in the epilogue).
    den_j_part = jnp.sum(e_jj, axis=1, keepdims=True) - jnp.exp(self_j * inv_t)

    # Pack the three per-row results into a single (TM, 8) store.
    lane = lax.broadcasted_iota(jnp.int32, (TM, 8), 1)
    packed = jnp.where(lane == 0, loss_i, 0.0)
    packed = jnp.where(lane == 1, den_j_part, packed)
    packed = jnp.where(lane == 2, pos, packed)
    packed_ref[...] = packed

    # Per-stripe partial column sum of exp(S_ij/T); broadcast over the 8
    # sublanes (the epilogue sums them, hence the 1/8 scale).
    cs = jnp.sum(e_ij, axis=0, keepdims=True) * 0.125        # (1, Bp)
    colsum_ref[...] = jnp.broadcast_to(cs, (8, Bp))


def contrastive_loss(emb_i, emb_j, *, temperature: float = 0.5,
                     tile_m: int = 256, matmul_dtype=MATMUL_DTYPE,
                     vmem_limit_bytes: int = 56 * 1024 * 1024):
    assert emb_i.shape == emb_j.shape and emb_i.ndim == 2
    B, D = emb_i.shape
    inv_t = 1.0 / float(temperature)

    # ---- normalise ONCE in the wrapper (F.normalize: x / max(||x||, 1e-12)).
    def _norm(x):
        x = x.astype(jnp.float32)
        ssq = jnp.sum(x * x, axis=1, keepdims=True)
        return x * lax.rsqrt(jnp.maximum(ssq, 1e-24))
    z_i, z_j = _norm(emb_i), _norm(emb_j)

    # ---- stripe size: multiple of the sublane granularity; keep >= 2 stripes
    # on medium batches so the "parallel" axis can feed both v7x TensorCores.
    row_align = 8
    if matmul_dtype is not None:
        row_align = max(8, 32 // jnp.dtype(matmul_dtype).itemsize)   # 16 for bf16
    tile_m = max(row_align, (tile_m // row_align) * row_align)
    if B > tile_m:
        TM = tile_m
    elif B >= 2 * row_align and B % (2 * row_align) == 0:
        TM = B // 2
    else:
        TM = B
    G = -(-B // TM)
    Bp = G * TM

    if Bp != B:
        z_i = jnp.pad(z_i, ((0, Bp - B), (0, 0)))   # zero rows -> masked in-kernel
        z_j = jnp.pad(z_j, ((0, Bp - B), (0, 0)))
    if matmul_dtype is not None:
        z_i = z_i.astype(matmul_dtype)
        z_j = z_j.astype(matmul_dtype)

    kernel = functools.partial(
        _ntxent_stripe_kernel, batch_size=B, padded_batch=Bp, tile_m=TM,
        temperature=float(temperature))

    out_shape = (
        jax.ShapeDtypeStruct((Bp, 8), jnp.float32),      # lanes 0..2: loss_i, den_j part, pos
        jax.ShapeDtypeStruct((8 * G, Bp), jnp.float32),  # per-stripe colsum(exp(S_ij/T))/8
    )
    in_specs = [
        # Residents: full-array block + constant index map -> fetched once.
        # TODO(synk): pipeline_mode=pl.Buffered(1) would drop the unused second
        # resident buffer on v7x once confirmed supported in the target JAX.
        pl.BlockSpec((Bp, D), lambda t: (0, 0)),
        pl.BlockSpec((Bp, D), lambda t: (0, 0)),
    ]
    out_specs = (
        pl.BlockSpec((TM, 8), lambda t: (t, 0)),
        pl.BlockSpec((8, Bp), lambda t: (t, 0)),
    )
    itemsize = jnp.dtype(z_i.dtype).itemsize
    cost = pl.CostEstimate(
        flops=2 * 3 * Bp * Bp * D,
        transcendentals=3 * Bp * Bp + 3 * Bp,
        bytes_accessed=2 * Bp * D * itemsize             # residents, read once
                       + (Bp * 8 + 8 * G * Bp) * 4)      # packed rows + colsums

    packed, colsum = pl.pallas_call(
        kernel,
        out_shape=out_shape,
        grid=(G,),
        in_specs=in_specs,
        out_specs=out_specs,
        compiler_params=pltpu.CompilerParams(
            dimension_semantics=("parallel",),
            vmem_limit_bytes=vmem_limit_bytes),
        cost_estimate=cost,
    )(z_i, z_j)

    # ---- tiny O(B) epilogue: fold the cross-stripe column sums into the
    # j-half denominators and take the mean over all 2B rows.
    loss_i = packed[:B, 0]
    den_j = packed[:B, 1] + jnp.sum(colsum, axis=0)[:B]
    pos = packed[:B, 2]
    loss_j = jnp.log(den_j) - pos * inv_t
    return (jnp.sum(loss_i) + jnp.sum(loss_j)) / (2.0 * B)


def _reference_loss(emb_i, emb_j, temperature=0.5):
    # pure-JAX reference mirroring the PyTorch module
    def norm(x):
        return x / jnp.maximum(jnp.linalg.norm(x, axis=1, keepdims=True), 1e-12)
    z_i, z_j = norm(emb_i), norm(emb_j)
    reps = jnp.concatenate([z_i, z_j], axis=0)
    sim = reps @ reps.T
    B = emb_i.shape[0]
    sim_ij = jnp.diagonal(sim, offset=B)
    sim_ji = jnp.diagonal(sim, offset=-B)
    positives = jnp.concatenate([sim_ij, sim_ji], axis=0)
    neg_mask = 1.0 - jnp.eye(2 * B)
    nom = jnp.exp(positives / temperature)
    den = jnp.sum(neg_mask * jnp.exp(sim / temperature), axis=1)
    return jnp.sum(-jnp.log(nom / den)) / (2 * B)


if __name__ == "__main__":
    key = jax.random.PRNGKey(0)
    k1, k2 = jax.random.split(key)

    batch, hidden = 8, 32
    emb_i = jax.random.normal(k1, (batch, hidden), dtype=jnp.float32)
    emb_j = jax.random.normal(k2, (batch, hidden), dtype=jnp.float32)
    ref = _reference_loss(emb_i, emb_j)

    # default path: bf16 MXU operands, f32 accumulation
    loss_bf16 = jax.jit(contrastive_loss)(emb_i, emb_j)
    jax.block_until_ready(loss_bf16)
    assert jnp.allclose(loss_bf16, ref, atol=2e-2, rtol=2e-2), (loss_bf16, ref)

    # f32 matmul path: should match the reference tightly
    loss_f32 = jax.jit(functools.partial(contrastive_loss, matmul_dtype=None))(
        emb_i, emb_j)
    jax.block_until_ready(loss_f32)
    assert jnp.allclose(loss_f32, ref, atol=1e-5, rtol=1e-5), (loss_f32, ref)

    # multi-stripe + padded-last-stripe path (B=12, TM=8 -> G=2, Bp=16)
    e1 = jax.random.normal(jax.random.PRNGKey(1), (12, hidden), dtype=jnp.float32)
    e2 = jax.random.normal(jax.random.PRNGKey(2), (12, hidden), dtype=jnp.float32)
    loss_multi = jax.jit(functools.partial(
        contrastive_loss, tile_m=8, matmul_dtype=None))(e1, e2)
    jax.block_until_ready(loss_multi)
    ref_multi = _reference_loss(e1, e2)
    assert jnp.allclose(loss_multi, ref_multi, atol=1e-5, rtol=1e-5), (loss_multi, ref_multi)

    print("KERNEL_OK")
</pallas_src>

<mosaic_0001>
module attributes {stable_mosaic.version = 11 : i64} {
  func.func @_ntxent_stripe_kernel(%arg0: i32, %arg1: memref<8x32xbf16, #tpu.memory_space<vmem>>, %arg2: memref<8x32xbf16, #tpu.memory_space<vmem>>, %arg3: memref<8x8xf32, #tpu.memory_space<vmem>>, %arg4: memref<8x8xf32, #tpu.memory_space<vmem>>) attributes {dimension_semantics = [#tpu.dimension_semantics<parallel>], iteration_bounds = array<i64: 1>, scalar_prefetch = 0 : i64, scratch_operands = 0 : i64, tpu.core_type = #tpu.core_type<tc>, window_params = [{pipeline_mode = #tpu.pipeline_mode<synchronous>, transform_indices = @transform_0, window_bounds = array<i64: 8, 32>}, {pipeline_mode = #tpu.pipeline_mode<synchronous>, transform_indices = @transform_1, window_bounds = array<i64: 8, 32>}, {transform_indices = @transform_2, window_bounds = array<i64: 8, 8>}, {transform_indices = @transform_3, window_bounds = array<i64: 8, 8>}]} {
    %c8_i32 = arith.constant 8 : i32
    %0 = arith.muli %arg0, %c8_i32 : i32
    %1 = tpu.assume_multiple %0, 8 : i32
    %2 = arith.index_cast %1 : i32 to index
    %c0 = arith.constant 0 : index
    %3 = vector.load %arg1[%2, %c0] : memref<8x32xbf16, #tpu.memory_space<vmem>>, vector<8x32xbf16>
    %4 = arith.index_cast %1 : i32 to index
    %c0_0 = arith.constant 0 : index
    %5 = vector.load %arg2[%4, %c0_0] : memref<8x32xbf16, #tpu.memory_space<vmem>>, vector<8x32xbf16>
    %6 = arith.extf %3 : vector<8x32xbf16> to vector<8x32xf32>
    %7 = arith.extf %5 : vector<8x32xbf16> to vector<8x32xf32>
    %8 = arith.mulf %6, %7 : vector<8x32xf32>
    %cst = arith.constant dense<0.000000e+00> : vector<8xf32>
    %9 = vector.multi_reduction <add>, %8, %cst [1] : vector<8x32xf32> to vector<8xf32>
    %10 = vector.shape_cast %9 : vector<8xf32> to vector<8x1xf32>
    %11 = arith.mulf %6, %6 : vector<8x32xf32>
    %cst_1 = arith.constant dense<0.000000e+00> : vector<8xf32>
    %12 = vector.multi_reduction <add>, %11, %cst_1 [1] : vector<8x32xf32> to vector<8xf32>
    %13 = vector.shape_cast %12 : vector<8xf32> to vector<8x1xf32>
    %14 = arith.mulf %7, %7 : vector<8x32xf32>
    %cst_2 = arith.constant dense<0.000000e+00> : vector<8xf32>
    %15 = vector.multi_reduction <add>, %14, %cst_2 [1] : vector<8x32xf32> to vector<8xf32>
    %16 = vector.shape_cast %15 : vector<8xf32> to vector<8x1xf32>
    %c0_3 = arith.constant 0 : index
    %c0_4 = arith.constant 0 : index
    %17 = vector.load %arg1[%c0_3, %c0_4] : memref<8x32xbf16, #tpu.memory_space<vmem>>, vector<8x32xbf16>
    %cst_5 = arith.constant dense<0.000000e+00> : vector<8x8xf32>
    %18 = tpu.matmul %3, %17, %cst_5 {dimension_numbers = #tpu.dot_dimension_numbers<[1], [1], [0], [0], [0, 0, 1, 0], [], []>} : vector<8x32xbf16>, vector<8x32xbf16>, vector<8x8xf32> -> vector<8x8xf32>
    %c0_6 = arith.constant 0 : index
    %c0_7 = arith.constant 0 : index
    %19 = vector.load %arg2[%c0_6, %c0_7] : memref<8x32xbf16, #tpu.memory_space<vmem>>, vector<8x32xbf16>
    %cst_8 = arith.constant dense<0.000000e+00> : vector<8x8xf32>
    %20 = tpu.matmul %3, %19, %cst_8 {dimension_numbers = #tpu.dot_dimension_numbers<[1], [1], [0], [0], [0, 0, 1, 0], [], []>} : vector<8x32xbf16>, vector<8x32xbf16>, vector<8x8xf32> -> vector<8x8xf32>
    %c0_9 = arith.constant 0 : index
    %c0_10 = arith.constant 0 : index
    %21 = vector.load %arg2[%c0_9, %c0_10] : memref<8x32xbf16, #tpu.memory_space<vmem>>, vector<8x32xbf16>
    %cst_11 = arith.constant dense<0.000000e+00> : vector<8x8xf32>
    %22 = tpu.matmul %5, %21, %cst_11 {dimension_numbers = #tpu.dot_dimension_numbers<[1], [1], [0], [0], [0, 0, 1, 0], [], []>} : vector<8x32xbf16>, vector<8x32xbf16>, vector<8x8xf32> -> vector<8x8xf32>
    %cst_12 = arith.constant 2.000000e+00 : f32
    %23 = vector.broadcast %cst_12 : f32 to vector<8x8xf32>
    %24 = arith.mulf %18, %23 : vector<8x8xf32>
    %25 = math.exp %24 : vector<8x8xf32>
    %cst_13 = arith.constant 2.000000e+00 : f32
    %26 = vector.broadcast %cst_13 : f32 to vector<8x8xf32>
    %27 = arith.mulf %20, %26 : vector<8x8xf32>
    %28 = math.exp %27 : vector<8x8xf32>
    %cst_14 = arith.constant 2.000000e+00 : f32
    %29 = vector.broadcast %cst_14 : f32 to vector<8x8xf32>
    %30 = arith.mulf %22, %29 : vector<8x8xf32>
    %31 = math.exp %30 : vector<8x8xf32>
    %cst_15 = arith.constant dense<0.000000e+00> : vector<8xf32>
    %32 = vector.multi_reduction <add>, %25, %cst_15 [1] : vector<8x8xf32> to vector<8xf32>
    %33 = vector.shape_cast %32 : vector<8xf32> to vector<8x1xf32>
    %cst_16 = arith.constant dense<0.000000e+00> : vector<8xf32>
    %34 = vector.multi_reduction <add>, %28, %cst_16 [1] : vector<8x8xf32> to vector<8xf32>
    %35 = vector.shape_cast %34 : vector<8xf32> to vector<8x1xf32>
    %36 = arith.addf %33, %35 : vector<8x1xf32>
    %cst_17 = arith.constant 2.000000e+00 : f32
    %37 = vector.broadcast %cst_17 : f32 to vector<8x1xf32>
    %38 = arith.mulf %13, %37 : vector<8x1xf32>
    %39 = math.exp %38 : vector<8x1xf32>
    %40 = arith.subf %36, %39 : vector<8x1xf32>
    %41 = math.log %40 : vector<8x1xf32>
    %cst_18 = arith.constant 2.000000e+00 : f32
    %42 = vector.broadcast %cst_18 : f32 to vector<8x1xf32>
    %43 = arith.mulf %10, %42 : vector<8x1xf32>
    %44 = arith.subf %41, %43 : vector<8x1xf32>
    %cst_19 = arith.constant dense<0.000000e+00> : vector<8xf32>
    %45 = vector.multi_reduction <add>, %31, %cst_19 [1] : vector<8x8xf32> to vector<8xf32>
    %46 = vector.shape_cast %45 : vector<8xf32> to vector<8x1xf32>
    %cst_20 = arith.constant 2.000000e+00 : f32
    %47 = vector.broadcast %cst_20 : f32 to vector<8x1xf32>
    %48 = arith.mulf %16, %47 : vector<8x1xf32>
    %49 = math.exp %48 : vector<8x1xf32>
    %50 = arith.subf %46, %49 : vector<8x1xf32>
    %51 = tpu.iota {dimensions = array<i32: 1>} : vector<8x8xi32>
    %c0_i32 = arith.constant 0 : i32
    %52 = vector.broadcast %c0_i32 : i32 to vector<8x8xi32>
    %53 = arith.cmpi eq, %51, %52 : vector<8x8xi32>
    %cst_21 = arith.constant 0.000000e+00 : f32
    %54 = vector.shape_cast %44 : vector<8x1xf32> to vector<8x1xf32>
    %55 = vector.broadcast %54 : vector<8x1xf32> to vector<8x8xf32>
    %56 = vector.broadcast %cst_21 : f32 to vector<8x8xf32>
    %57 = arith.select %53, %55, %56 : vector<8x8xi1>, vector<8x8xf32>
    %c1_i32 = arith.constant 1 : i32
    %58 = vector.broadcast %c1_i32 : i32 to vector<8x8xi32>
    %59 = arith.cmpi eq, %51, %58 : vector<8x8xi32>
    %60 = vector.shape_cast %50 : vector<8x1xf32> to vector<8x1xf32>
    %61 = vector.broadcast %60 : vector<8x1xf32> to vector<8x8xf32>
    %62 = arith.select %59, %61, %57 : vector<8x8xi1>, vector<8x8xf32>
    %c2_i32 = arith.constant 2 : i32
    %63 = vector.broadcast %c2_i32 : i32 to vector<8x8xi32>
    %64 = arith.cmpi eq, %51, %63 : vector<8x8xi32>
    %65 = vector.shape_cast %10 : vector<8x1xf32> to vector<8x1xf32>
    %66 = vector.broadcast %65 : vector<8x1xf32> to vector<8x8xf32>
    %67 = arith.select %64, %66, %62 : vector<8x8xi1>, vector<8x8xf32>
    %c0_22 = arith.constant 0 : index
    %c0_23 = arith.constant 0 : index
    %68 = vector.load %arg3[%c0_22, %c0_23] : memref<8x8xf32, #tpu.memory_space<vmem>>, vector<8x8xf32>
    tpu.vector_store %arg3[%c0_22, %c0_23], %67 {strides = array<i32>} : memref<8x8xf32, #tpu.memory_space<vmem>>, vector<8x8xf32>,
    %cst_24 = arith.constant dense<0.000000e+00> : vector<8xf32>
    %69 = vector.multi_reduction <add>, %28, %cst_24 [0] : vector<8x8xf32> to vector<8xf32>
    %70 = vector.shape_cast %69 : vector<8xf32> to vector<1x8xf32>
    %cst_25 = arith.constant 1.250000e-01 : f32
    %71 = vector.broadcast %cst_25 : f32 to vector<1x8xf32>
    %72 = arith.mulf %70, %71 : vector<1x8xf32>
    %73 = vector.shape_cast %72 : vector<1x8xf32> to vector<1x8xf32>
    %74 = vector.broadcast %73 : vector<1x8xf32> to vector<8x8xf32>
    %c0_26 = arith.constant 0 : index
    %c0_27 = arith.constant 0 : index
    %75 = vector.load %arg4[%c0_26, %c0_27] : memref<8x8xf32, #tpu.memory_space<vmem>>, vector<8x8xf32>
    tpu.vector_store %arg4[%c0_26, %c0_27], %74 {strides = array<i32>} : memref<8x8xf32, #tpu.memory_space<vmem>>, vector<8x8xf32>,
    return
  }
  func.func @transform_0(%arg0: i32) -> (i32, i32) {
    %c0_i32 = arith.constant 0 : i32
    %c0_i32_0 = arith.constant 0 : i32
    %c0_i32_1 = arith.constant 0 : i32
    return %c0_i32, %c0_i32_0 : i32, i32
  }
  func.func @transform_1(%arg0: i32) -> (i32, i32) {
    %c0_i32 = arith.constant 0 : i32
    %c0_i32_0 = arith.constant 0 : i32
    %c0_i32_1 = arith.constant 0 : i32
    return %c0_i32, %c0_i32_0 : i32, i32
  }
  func.func @transform_2(%arg0: i32) -> (i32, i32) {
    %c0_i32 = arith.constant 0 : i32
    %c0_i32_0 = arith.constant 0 : i32
    return %arg0, %c0_i32 : i32, i32
  }
  func.func @transform_3(%arg0: i32) -> (i32, i32) {
    %c0_i32 = arith.constant 0 : i32
    %c0_i32_0 = arith.constant 0 : i32
    return %arg0, %c0_i32 : i32, i32
  }
}

</mosaic_0001>

<llo_original>
// kernel: contrastive_loss.1
$region0: #{contrastive_loss.1}
  #allocation0 [shape = 'u32[]', space=smem, size = 0x4, offset = 0x4, fixed_abs, tag = 'smem constant byte address 0x4 - core index']
  #allocation1 [shape = 'u32[72,128]{1,0:T(1,128)}', space=vmem, size = 0x9000, scoped, tag = 'internal scratch']
  %s0 = inlined_call_operand.vmem [shape: bf16[8,32], index: 0, kind: input, shape index: {}]
  %s1 = inlined_call_operand.vmem [shape: bf16[8,32], index: 1, kind: input, shape index: {}]
  %s2 = inlined_call_operand.vmem [shape: f32[8,8], index: 2, kind: output, shape index: {0}]
  %s3 = inlined_call_operand.vmem [shape: f32[8,8], index: 3, kind: output, shape index: {1}]
  %4 = xla_tuple %s2, %s3
  %s5 = sld [smem:[#allocation0]]
  $region26: #{contrastive_loss.1} parent=0
    _
  %s7 = ssub.s32 1, %s5
  %s8 = scalar_select 0, %s7, %s5
  // Predicated region
  $region2: #{contrastive_loss.1} parent=0 // pred_check
    _
  $region3: #{contrastive_loss.1} parent=0 // pred_check_branch
    %10 = sbr.rel (0) target = $region5
  $region4: #{contrastive_loss.1} parent=0 // pred_region
    _
  $region5: #{contrastive_loss.1} parent=0 // pred_fallthru
    _
  // Predicated region
  $region6: #{contrastive_loss.1} parent=0 // pred_check
    _
  $region7: #{contrastive_loss.1} parent=0 // pred_check_branch
    %12 = sbr.rel (0) target = $region9
  $region8: #{contrastive_loss.1} parent=0 // pred_region
    _
  $region9: #{contrastive_loss.1} parent=0 // pred_fallthru
    _
  %s14 = smul.u32 0, 8
  %s15 = sshra.s32 %s14, 3
  %s16 = sand.u32 %s14, 7
  %s17 = smul.addr %s15, 4
  %s18 = scalar_lea.vmem %s0, %s17
  %v19 = vld [vmem:[%s18] sm:$0xf]
  %s20 = smul.addr %s15, 4
  %s21 = scalar_lea.vmem %s1, %s20
  %v22 = vld [vmem:[%s21] sm:$0xf]
  %v23 = vunpack.c.l.bf16 %v19
  %v24 = vunpack.c.l.bf16 %v22
  %v25 = vmul.f32 %v23, %v24
  %vm26 = vcmask 261120
  %v27 = vsel %vm26, %v25, 0.0
  %28 = vadd.xlane.f32.xlu0 %v27
  %v29 = vpop.xlane.xlu0 %28
  %v30 = vmul.f32 %v23, %v23
  %v31 = vsel %vm26, %v30, 0.0
  %32 = vadd.xlane.f32.xlu0 %v31
  %v33 = vpop.xlane.xlu0 %32
  %v34 = vmul.f32 %v24, %v24
  %v35 = vsel %vm26, %v34, 0.0
  %36 = vadd.xlane.f32.xlu0 %v35
  %v37 = vpop.xlane.xlu0 %36
  %v38 = vld [vmem:[%s0] sm:$0xf]
  %v40 = vsel %vm26, %v19, 0
  %v43 = vsel %vm26, %v38, 0
  %45 = vmatpush.bf16.xpose.msra.mxu0 0
  %46 = vmatpush.bf16.xpose.msra.mxu0 0
  %47 = vmatpush.bf16.xpose.msra.mxu0 0
  %48 = vmatpush.bf16.xpose.msra.mxu0 0
  %49 = vmatpush.bf16.xpose.msra.mxu0 0
  %50 = vmatpush.bf16.xpose.msra.mxu0 0
  %51 = vmatpush.bf16.xpose.msra.mxu0 0
  %52 = vmatpush.bf16.xpose.msra.mxu0 %v43
  %53 = vmatmul.bf16.gmra.mxu0 %v40
  %v54 = vpop.f32.mrf.mxu0
  %v55 = vadd.f32 0.0, %v54
  %v56 = vpop.f32.mrf.mxu0
  %57 = vdwg.mxu0
  %v58 = vld [vmem:[%s1] sm:$0xf]
  %v60 = vsel %vm26, %v58, 0
  %62 = vmatpush.bf16.xpose.msra.mxu0 0
  %63 = vmatpush.bf16.xpose.msra.mxu0 0
  %64 = vmatpush.bf16.xpose.msra.mxu0 0
  %65 = vmatpush.bf16.xpose.msra.mxu0 0
  %66 = vmatpush.bf16.xpose.msra.mxu0 0
  %67 = vmatpush.bf16.xpose.msra.mxu0 0
  %68 = vmatpush.bf16.xpose.msra.mxu0 0
  %69 = vmatpush.bf16.xpose.msra.mxu0 %v60
  %70 = vmatmul.bf16.gmra.mxu0 %v40
  %v71 = vpop.f32.mrf.mxu0
  %v72 = vadd.f32 0.0, %v71
  %v73 = vpop.f32.mrf.mxu0
  %74 = vdwg.mxu0
  %v76 = vsel %vm26, %v22, 0
  %78 = vmatpush.bf16.xpose.msra.mxu0 0
  %79 = vmatpush.bf16.xpose.msra.mxu0 0
  %80 = vmatpush.bf16.xpose.msra.mxu0 0
  %81 = vmatpush.bf16.xpose.msra.mxu0 0
  %82 = vmatpush.bf16.xpose.msra.mxu0 0
  %83 = vmatpush.bf16.xpose.msra.mxu0 0
  %84 = vmatpush.bf16.xpose.msra.mxu0 0
  %85 = vmatpush.bf16.xpose.msra.mxu0 %v60
  %86 = vmatmul.bf16.gmra.mxu0 %v76
  %v87 = vpop.f32.mrf.mxu0
  %v88 = vadd.f32 0.0, %v87
  %v89 = vpop.f32.mrf.mxu0
  %90 = vdwg.mxu0
  %v91 = vmul.f32 %v55, 2.0
  %v92 = vmul.f32 %v91, 1.442695
  %v93 = vpow.pop %v92
  %v94 = vmul.f32 %v72, 2.0
  %v95 = vmul.f32 %v94, 1.442695
  %v96 = vpow.pop %v95
  %v97 = vmul.f32 %v88, 2.0
  %v98 = vmul.f32 %v97, 1.442695
  %v99 = vpow.pop %v98
  %vm100 = vcmask 64512
  %v101 = vsel %vm100, %v93, 0.0
  %102 = vadd.xlane.f32.xlu0 %v101
  %v103 = vpop.xlane.xlu0 %102
  %v104 = vsel %vm100, %v96, 0.0
  %105 = vadd.xlane.f32.xlu0 %v104
  %v106 = vpop.xlane.xlu0 %105
  %v107 = vadd.f32 %v103, %v106
  %v108 = vmul.f32 %v33, 2.0
  %v109 = vmul.f32 %v108, 1.442695
  %v110 = vpow.pop %v109
  %v111 = vsub.f32 %v107, %v110
  %v112 = vlog2.pop %v111
  %v113 = vmul.f32 %v112, 0.6931472
  %v114 = vmul.f32 %v29, 2.0
  %v115 = vsub.f32 %v113, %v114
  %v116 = vsel %vm100, %v99, 0.0
  %117 = vadd.xlane.f32.xlu0 %v116
  %v118 = vpop.xlane.xlu0 %117
  %v119 = vmul.f32 %v37, 2.0
  %v120 = vmul.f32 %v119, 1.442695
  %v121 = vpow.pop %v120
  %v122 = vsub.f32 %v118, %v121
  %v123 = vlaneseq
  %v124 = vand.u32 %v123, 127
  %vm125 = vcmp.eq.s32.totalorder %v124, 0
  %v126 = vsel %vm125, %v115, 0.0
  %vm127 = vcmp.eq.s32.totalorder %v124, 1
  %v128 = vsel %vm127, %v122, %v126
  %vm129 = vcmp.eq.s32.totalorder %v124, 2
  %v130 = vsel %vm129, %v29, %v128
  %131 = vst.msk [vmem:[%s2] sm:$0xff] %vm100, %v130
  %v132 = vrot.slane %v104, 4
  %v133 = vadd.f32 %v104, %v132
  %v134 = vrot.slane %v133, 2
  %v135 = vadd.f32 %v133, %v134
  %v136 = vrot.slane %v135, 1
  %v137 = vadd.f32 %v135, %v136
  %v138 = vmul.f32 %v137, 0.125
  %139 = vst.msk [vmem:[%s3] sm:$0xff] %vm100, %v138
  // Predicated region
  $region10: #{contrastive_loss.1} parent=0 // pred_check
    _
  $region11: #{contrastive_loss.1} parent=0 // pred_check_branch
    %141 = sbr.rel (0) target = $region13
  $region12: #{contrastive_loss.1} parent=0 // pred_region
    _
  $region13: #{contrastive_loss.1} parent=0 // pred_fallthru
    _
  // Predicated region
  $region14: #{contrastive_loss.1} parent=0 // pred_check
    _
  $region15: #{contrastive_loss.1} parent=0 // pred_check_branch
    %143 = sbr.rel (0) target = $region17
  $region16: #{contrastive_loss.1} parent=0 // pred_region
    _
  $region17: #{contrastive_loss.1} parent=0 // pred_fallthru
    _
  // Predicated region
  $region18: #{contrastive_loss.1} parent=0 // pred_check
    _
  $region19: #{contrastive_loss.1} parent=0 // pred_check_branch
    %145 = sbr.rel (0) target = $region21
  $region20: #{contrastive_loss.1} parent=0 // pred_region
    _
  $region21: #{contrastive_loss.1} parent=0 // pred_fallthru
    _
  // Predicated region
  $region22: #{contrastive_loss.1} parent=0 // pred_check
    _
  $region23: #{contrastive_loss.1} parent=0 // pred_check_branch
    %147 = sbr.rel (0) target = $region25
  $region24: #{contrastive_loss.1} parent=0 // pred_region
    _
  $region25: #{contrastive_loss.1} parent=0 // pred_fallthru
    _

</llo_original>
